<compile_context>
chip_gen: v7x
topology: tpu7x:2x2x1
jax: 0.10.0
libtpu: 0.0.40
codegen_flags: <defaults>
</compile_context>

<pallas_src>
import functools

import jax
import jax.numpy as jnp
from jax import lax
from jax.experimental import pallas as pl
from jax.experimental.pallas import tpu as pltpu


@functools.lru_cache(maxsize=1)
def _roll_is_numpy_convention() -> bool:
    """Detect pltpu.roll's rotation direction once on the real backend.

    np.roll convention: out[i] = in[(i - shift) % n] (data moves toward higher
    indices for positive shift).  The probe guarantees the conv2 taps use the
    correct direction regardless of the lowering's convention.
    """
    def probe(x_ref, o_ref):
        o_ref[...] = pltpu.roll(x_ref[...], shift=1, axis=1)

    x = lax.broadcasted_iota(jnp.float32, (8, 256), 1)
    y = pl.pallas_call(
        probe, out_shape=jax.ShapeDtypeStruct((8, 256), jnp.float32))(x)
    return bool(jax.device_get(y[0, 1]) == 0.0)


def _make_kernel(H, W, roll_is_np):
    HW = H * W

    def lane_shift(y, delta):
        # out[:, p] = y[:, p + delta]; wrapped entries are masked by the caller.
        if delta == 0:
            return y
        s = (-delta) % HW if roll_is_np else delta % HW
        return pltpu.roll(y, shift=s, axis=1)

    def kernel(x_ref, w1_ref, s1_ref, b1_ref,
               w2_ref, s2_ref, b2_ref,
               w3_ref, s3_ref, b3_ref, out_ref):
        x = x_ref[0].astype(jnp.float32)                        # (Cin, HW)

        # ---- conv1 (1x1) + bn1 + relu : (P,Cin)@(Cin,HW) on the MXU --------
        y1 = jnp.dot(w1_ref[...], x.astype(jnp.bfloat16),
                     preferred_element_type=jnp.float32)        # (P, HW)
        y1 = jnp.maximum(y1 * s1_ref[...] + b1_ref[...], 0.0)

        # ---- conv2 (3x3, pad=1, stride=1) + bn2 + relu ---------------------
        # 9 taps = lane rolls of y1 (XLU) + border masks; no pad scratch.
        pos = lax.broadcasted_iota(jnp.int32, (1, HW), 1)
        h_idx = pos // W
        w_idx = pos % W
        acc = jnp.zeros_like(y1)                                # (P, HW) f32
        for dy in range(3):
            for dx in range(3):
                oy, ox = dy - 1, dx - 1
                tap = lane_shift(y1, oy * W + ox)
                conds = []
                if oy < 0:
                    conds.append(h_idx >= -oy)
                if oy > 0:
                    conds.append(h_idx < H - oy)
                if ox < 0:
                    conds.append(w_idx >= -ox)
                if ox > 0:
                    conds.append(w_idx < W - ox)
                if conds:
                    valid = conds[0]
                    for c in conds[1:]:
                        valid = valid & c
                    tap = jnp.where(valid, tap, 0.0)
                acc = acc + jnp.dot(w2_ref[dy, dx],
                                    tap.astype(jnp.bfloat16),
                                    preferred_element_type=jnp.float32)
        y2 = jnp.maximum(acc * s2_ref[...] + b2_ref[...], 0.0)  # (P, HW)

        # ---- conv3 (1x1) + bn3 + residual add + relu -----------------------
        y3 = jnp.dot(w3_ref[...], y2.astype(jnp.bfloat16),
                     preferred_element_type=jnp.float32)        # (Cout, HW)
        y3 = y3 * s3_ref[...] + b3_ref[...]
        out_ref[0] = jnp.maximum(y3 + x, 0.0).astype(out_ref.dtype)

    return kernel


def bottleneck_pallas(x_nchw, params):
    N, Cin, H, W = x_nchw.shape
    P = params["w1"].shape[1]
    Cout = params["w3"].shape[1]
    if Cin != Cout:
        raise ValueError(
            "downsample=None requires inplanes == planes * expansion "
            f"(got Cin={Cin}, Cout={Cout})")
    HW = H * W

    x = x_nchw.reshape(N, Cin, HW)                    # free reshape (stays NCHW)

    # Weight prep: output-major transposes, bf16 matmul operands, and
    # folded-BN scale/bias reshaped to (C, 1) for lane broadcast.
    w1t = params["w1"].T.astype(jnp.bfloat16)                         # (P, Cin)
    w2t = jnp.transpose(params["w2"], (0, 1, 3, 2)).astype(jnp.bfloat16)  # (3,3,O,I)
    w3t = params["w3"].T.astype(jnp.bfloat16)                         # (Cout, P)
    s1 = params["s1"].reshape(P, 1)
    b1 = params["b1"].reshape(P, 1)
    s2 = params["s2"].reshape(P, 1)
    b2 = params["b2"].reshape(P, 1)
    s3 = params["s3"].reshape(Cout, 1)
    b3 = params["b3"].reshape(Cout, 1)

    kernel = _make_kernel(H, W, _roll_is_numpy_convention())

    def full(arr):
        return pl.BlockSpec(arr.shape, lambda n, _z=(0,) * arr.ndim: _z)

    out = pl.pallas_call(
        kernel,
        out_shape=jax.ShapeDtypeStruct((N, Cout, HW), x_nchw.dtype),
        grid_spec=pltpu.PrefetchScalarGridSpec(
            num_scalar_prefetch=0,
            grid=(N,),                      # one image per step; "parallel"
            in_specs=[                      # lets v7x use both TensorCores
                pl.BlockSpec((1, Cin, HW), lambda n: (n, 0, 0)),
                full(w1t), full(s1), full(b1),
                full(w2t), full(s2), full(b2),
                full(w3t), full(s3), full(b3),
            ],
            out_specs=pl.BlockSpec((1, Cout, HW), lambda n: (n, 0, 0)),
        ),
        compiler_params=pltpu.CompilerParams(
            dimension_semantics=("parallel",)),
    )(x, w1t, s1, b1, w2t, s2, b2, w3t, s3, b3)

    return out.reshape(N, Cout, H, W)                 # free reshape back to NCHW


def bottleneck_ref(x_nchw, params):
    """Pure-JAX reference (lax conv, NHWC) mirroring the kernel's bf16-operand,
    f32-accumulate numerics so the correctness check is tight."""
    q = lambda a: a.astype(jnp.bfloat16).astype(jnp.float32)
    x = jnp.transpose(x_nchw, (0, 2, 3, 1))
    Cin = x.shape[-1]
    P = params["w1"].shape[1]
    Cout = params["w3"].shape[1]
    dn = ("NHWC", "HWIO", "NHWC")
    y = lax.conv_general_dilated(q(x), q(params["w1"]).reshape(1, 1, Cin, P),
                                 (1, 1), "VALID", dimension_numbers=dn)
    y = jnp.maximum(y * params["s1"] + params["b1"], 0.0)
    y = lax.conv_general_dilated(q(y), q(params["w2"]), (1, 1),
                                 ((1, 1), (1, 1)), dimension_numbers=dn)
    y = jnp.maximum(y * params["s2"] + params["b2"], 0.0)
    y = lax.conv_general_dilated(q(y), q(params["w3"]).reshape(1, 1, P, Cout),
                                 (1, 1), "VALID", dimension_numbers=dn)
    y = y * params["s3"] + params["b3"]
    y = jnp.maximum(y + x, 0.0)
    return jnp.transpose(y, (0, 3, 1, 2))


def make_params(key, inplanes, planes, eps=1e-5):
    """Deterministic synthetic weights; BN folded to (scale, bias)."""
    expansion = 4
    cout = planes * expansion
    ks = jax.random.split(key, 15)

    def bn_fold(kg, kb, km, kv, c):
        gamma = 1.0 + 0.1 * jax.random.normal(kg, (c,), jnp.float32)
        beta = 0.1 * jax.random.normal(kb, (c,), jnp.float32)
        mean = 0.1 * jax.random.normal(km, (c,), jnp.float32)
        var = jnp.abs(jax.random.normal(kv, (c,), jnp.float32)) + 0.5
        scale = gamma / jnp.sqrt(var + eps)
        bias = beta - mean * scale
        return scale.reshape(1, c), bias.reshape(1, c)

    w1 = 0.1 * jax.random.normal(ks[0], (inplanes, planes), jnp.float32)
    s1, b1 = bn_fold(ks[1], ks[2], ks[3], ks[4], planes)
    w2 = 0.1 * jax.random.normal(ks[5], (3, 3, planes, planes), jnp.float32)
    s2, b2 = bn_fold(ks[6], ks[7], ks[8], ks[9], planes)
    w3 = 0.1 * jax.random.normal(ks[10], (planes, cout), jnp.float32)
    s3, b3 = bn_fold(ks[11], ks[12], ks[13], ks[14], cout)
    return dict(w1=w1, s1=s1, b1=b1, w2=w2, s2=s2, b2=b2,
                w3=w3, s3=s3, b3=b3)


if __name__ == "__main__":
    key = jax.random.PRNGKey(0)
    kx, kp = jax.random.split(key)

    # Bottleneck(inplanes=16, planes=4, stride=1, downsample=None)
    N, Cin, H, W = 2, 16, 16, 16
    planes = 4

    x = jax.random.normal(kx, (N, Cin, H, W), jnp.float32)
    params = make_params(kp, Cin, planes)

    out = jax.block_until_ready(bottleneck_pallas(x, params))
    ref = bottleneck_ref(x, params)

    assert out.shape == (N, Cin, H, W)
    if not jnp.allclose(out, ref, atol=1e-2, rtol=1e-2):
        err = float(jnp.max(jnp.abs(out - ref)))
        raise AssertionError(
            f"Pallas kernel mismatch vs JAX reference (max abs err {err})")
    print("KERNEL_OK")
</pallas_src>

<mosaic_0001>
module attributes {stable_mosaic.version = 11 : i64} {
  func.func @probe(%arg0: memref<8x256xf32, #tpu.memory_space<vmem>>, %arg1: memref<8x256xf32, #tpu.memory_space<vmem>>) attributes {dimension_semantics = [], scalar_prefetch = 0 : i64, scratch_operands = 0 : i64, tpu.core_type = #tpu.core_type<tc>} {
    %c0 = arith.constant 0 : index
    %c0_0 = arith.constant 0 : index
    %0 = vector.load %arg0[%c0, %c0_0] : memref<8x256xf32, #tpu.memory_space<vmem>>, vector<8x256xf32>
    %c1_i32 = arith.constant 1 : i32
    %1 = tpu.dynamic_rotate %0 by %c1_i32 dim 1 : vector<8x256xf32>, i32 -> vector<8x256xf32>
    %c0_1 = arith.constant 0 : index
    %c0_2 = arith.constant 0 : index
    %2 = vector.load %arg1[%c0_1, %c0_2] : memref<8x256xf32, #tpu.memory_space<vmem>>, vector<8x256xf32>
    tpu.vector_store %arg1[%c0_1, %c0_2], %1 {strides = array<i32>} : memref<8x256xf32, #tpu.memory_space<vmem>>, vector<8x256xf32>,
    return
  }
}

</mosaic_0001>

<llo_original>
// kernel: tpu_custom_call.1
$region0: #{tpu_custom_call.1}
  #allocation0 [shape = 'u32[]', space=smem, size = 0x4, offset = 0x4, fixed_abs, tag = 'smem constant byte address 0x4 - core index']
  #allocation1 [shape = 'u32[144,128]{1,0:T(1,128)}', space=vmem, size = 0x12000, scoped, tag = 'internal scratch']
  %s0 = inlined_call_operand.hbm [shape: f32[8,256], index: 0, kind: input, shape index: {}]
  %s1 = inlined_call_operand.hbm [shape: f32[8,256], index: 1, kind: output, shape index: {}]
  %s2 = sld [smem:[#allocation0]]
  $region18: #{tpu_custom_call.1} parent=0
    _
  %s4 = ssub.s32 1, %s2
  %s5 = scalar_select 0, %s4, %s2
  $region1: #{tpu_custom_call.1} parent=0
    #allocation2 [shape = 'u8[8192]{0}', space=vmem, size = 0x2000, scoped, tag = 'input window, operand 0, single buffered']
    #allocation3 [shape = 's32[1]{0}', space=sflag, size = 0x4, scoped, tag = 'scoped memory for tpu_custom_call.1']
    #allocation4 [shape = 's32[1]{0}', space=sflag, size = 0x4, scoped, tag = 'scoped memory for tpu_custom_call.1']
    #allocation5 [shape = 'u8[8192]{0}', space=vmem, size = 0x2000, scoped, tag = 'output window, operand 0, single buffered']
    %6 = vsyncpa [#allocation3], 0
    %7 = vsyncpa [#allocation4], 0
    // Predicated region
    $region2: #{tpu_custom_call.1} parent=1 // pred_check
      _
    $region3: #{tpu_custom_call.1} parent=1 // pred_check_branch
      %9 = sbr.rel (0) target = $region5
    $region4: #{tpu_custom_call.1} parent=1 // pred_region
      %s11 = ssub.s32 256, 256
      %12 = vsyncadd [#allocation3], %s11
      %s14 = sshll.u32 [#allocation2], 4
      %s15 = int_to_ptr.vmem [resolvable:$true] %s14
      %17 = dma.hbm_to_vmem [thread:$0]  %s0, 256, %s15, [#allocation3]
    $region5: #{tpu_custom_call.1} parent=1 // pred_fallthru
      _
    // Predicated region
    $region6: #{tpu_custom_call.1} parent=1 // pred_check
      _
    $region7: #{tpu_custom_call.1} parent=1 // pred_check_branch
      %19 = sbr.rel (0) target = $region9
    $region8: #{tpu_custom_call.1} parent=1 // pred_region
      %20 = dma.done [#allocation3], 256
    $region9: #{tpu_custom_call.1} parent=1 // pred_fallthru
      _
    %v21 = vld [vmem:[#allocation2] sm:$0xff]
    %v22 = vld [vmem:[#allocation2 + $0x8] sm:$0xff]
    %23 = vrot.lane.b32.xlu0 %v21, 1
    %v24 = vpop.permute.xlu0 %23
    %25 = vrot.lane.b32.xlu0 %v22, 1
    %v26 = vpop.permute.xlu0 %25
    %v27 = vlaneseq
    %v28 = vand.u32 %v27, 127
    %vm29 = vcmp.lt.s32.totalorder %v28, 1
    %v30 = vsel %vm29, %v24, %v26
    %v31 = vsel %vm29, %v26, %v24
    %32 = vst [vmem:[#allocation5] sm:$0xff] %v31
    %33 = vst [vmem:[#allocation5 + $0x8] sm:$0xff] %v30
    // Predicated region
    $region10: #{tpu_custom_call.1} parent=1 // pred_check
      _
    $region11: #{tpu_custom_call.1} parent=1 // pred_check_branch
      %35 = sbr.rel (0) target = $region13
    $region12: #{tpu_custom_call.1} parent=1 // pred_region
      %s37 = ssub.s32 256, 256
      %38 = vsyncadd [#allocation4], %s37
      %s40 = sshll.u32 [#allocation5], 4
      %s41 = int_to_ptr.vmem [resolvable:$true] %s40
      %43 = dma.vmem_to_hbm [thread:$0]  %s41, 256, %s1, [#allocation4]
    $region13: #{tpu_custom_call.1} parent=1 // pred_fallthru
      _
    // Predicated region
    $region14: #{tpu_custom_call.1} parent=1 // pred_check
      _
    $region15: #{tpu_custom_call.1} parent=1 // pred_check_branch
      %45 = sbr.rel (0) target = $region17
    $region16: #{tpu_custom_call.1} parent=1 // pred_region
      %46 = dma.done [#allocation4], 256
    $region17: #{tpu_custom_call.1} parent=1 // pred_fallthru
      _
    %47 = vsyncpa [#allocation3], 1
    %48 = vsyncpa [#allocation4], 1

</llo_original>
